<compile_context>
chip_gen: v7x
topology: tpu7x:2x2x1
jax: 0.10.0
libtpu: 0.0.40
codegen_flags: <defaults>
</compile_context>

<pallas_src>
import functools

import jax
import jax.numpy as jnp
from jax import lax
from jax.experimental import pallas as pl
from jax.experimental.pallas import tpu as pltpu


def _ce_kernel(x_ref, t_ref, w_ref, out_ref, *, n, hw):
    bi = pl.program_id(0)   # batch-tile index
    pi = pl.program_id(1)   # pixel-tile index

    x = x_ref[...].astype(jnp.float32)   # [tn, C, ts, 128] logits
    t = t_ref[...].astype(jnp.float32)   # [tn, C, ts, 128] target scores
    w = w_ref[...]                       # [1,  C, 1,  128] class weights (f32)

    tn, c, ts, _ = x.shape

    # class index per slice (constant within each vreg -> VPU-only compares)
    cls = lax.broadcasted_iota(jnp.int32, x.shape, 1)

    # argmax over classes, first-max tie-break (matches torch.argmax)
    t_max = jnp.max(t, axis=1, keepdims=True)                            # [tn,1,ts,128]
    idx = jnp.min(jnp.where(t >= t_max, cls, c), axis=1, keepdims=True)  # [tn,1,ts,128]
    sel = (cls == idx).astype(jnp.float32)                               # one-hot [tn,C,ts,128]

    # log-softmax over classes; gather the target-class logit via the one-hot
    m = jnp.max(x, axis=1, keepdims=True)                                # [tn,1,ts,128]
    lse = jnp.log(jnp.sum(jnp.exp(x - m), axis=1, keepdims=True)) + m    # [tn,1,ts,128]
    x_t = jnp.sum(x * sel, axis=1, keepdims=True)                        # [tn,1,ts,128]
    loss = (lse - x_t)[:, 0]                                             # [tn,ts,128]
    w_pix = jnp.sum(w * sel, axis=1)                                     # [tn,ts,128]

    # validity mask: rows past N and pixels past HW are boundary garbage
    samp = lax.broadcasted_iota(jnp.int32, loss.shape, 0) + bi * tn
    sub = lax.broadcasted_iota(jnp.int32, loss.shape, 1)
    lane = lax.broadcasted_iota(jnp.int32, loss.shape, 2)
    pix = (pi * ts + sub) * 128 + lane
    valid = (samp < n) & (pix < hw)

    part_loss = jnp.sum(jnp.where(valid, loss * w_pix, 0.0))
    part_w = jnp.sum(jnp.where(valid, w_pix, 0.0))

    # write the two scalar partials into lane 0 of rows 0 / 1; zeros elsewhere
    row8 = lax.broadcasted_iota(jnp.int32, (8, 128), 0)
    lane8 = lax.broadcasted_iota(jnp.int32, (8, 128), 1)
    vals = jnp.where(
        lane8 == 0,
        jnp.where(row8 == 0, part_loss, jnp.where(row8 == 1, part_w, 0.0)),
        0.0,
    )
    out_ref[...] = vals.reshape(out_ref.shape)


def ce_with_logits_loss(logits_nchw, target_nchw, weight=None, *,
                        target_block_elems=None):
    """Equivalent to nn.CrossEntropyLoss(weight)(logits, target.argmax(dim=1))."""
    n, c, h, w_sp = logits_nchw.shape
    hw = h * w_sp
    p_sub = pl.cdiv(hw, 128)
    hw_pad = p_sub * 128

    # Layout-preserving reshape to class-major, then pixel axis -> (P_sub, 128).
    x = logits_nchw.reshape(n, c, hw)
    t = target_nchw.reshape(n, c, hw)
    if hw_pad != hw:
        pad = [(0, 0), (0, 0), (0, hw_pad - hw)]
        x = jnp.pad(x, pad)
        t = jnp.pad(t, pad)
    x = x.reshape(n, c, p_sub, 128)
    t = t.reshape(n, c, p_sub, 128)

    if weight is None:
        w_vec = jnp.ones((c,), dtype=jnp.float32)
    else:
        w_vec = jnp.asarray(weight, dtype=jnp.float32).reshape(c)
    w_rep = jnp.broadcast_to(w_vec.reshape(1, c, 1, 1), (1, c, 1, 128))

    itemsize = max(jnp.dtype(x.dtype).itemsize, jnp.dtype(t.dtype).itemsize)

    if target_block_elems is None:
        # ~2 MiB of f32-equivalent work per input block (mem-bound: big tiles).
        target_block_elems = (2 << 20) // 4

    slab_elems = c * p_sub * 128            # one sample's (padded) element count
    if slab_elems <= target_block_elems:
        # Small per-sample slab: tile over the batch (one long contiguous DMA).
        tile_sub = p_sub
        tile_n = int(max(1, min(n, target_block_elems // slab_elems)))
    else:
        # Large image: tile over the pixel-sublane axis.
        tile_n = 1
        tile_sub = int(max(8, (target_block_elems // (c * 128)) // 8 * 8))
        tile_sub = min(tile_sub, p_sub)

    grid_n = pl.cdiv(n, tile_n)
    grid_p = pl.cdiv(p_sub, tile_sub)

    # v7x: make sure there are >= 2 parallel grid steps so both TCs get work.
    if grid_n * grid_p == 1:
        if n >= 2:
            tile_n = pl.cdiv(n, 2)
            grid_n = pl.cdiv(n, tile_n)
        elif p_sub >= 16:
            tile_sub = min(p_sub, ((pl.cdiv(p_sub, 2) + 7) // 8) * 8)
            grid_p = pl.cdiv(p_sub, tile_sub)

    # VMEM budget from the ACTUAL block sizes: 2 inputs x 2 buffers in native
    # dtype + ~10 f32-block-sized in-kernel temporaries + headroom; clamp so
    # it is generous on v5e/v6e but inside v7x's 64 MiB physical VMEM.
    blk_elems = tile_n * c * tile_sub * 128
    vmem_est = 2 * 2 * blk_elems * itemsize + 10 * blk_elems * 4 + (2 << 20)
    vmem_limit = int(min(max(vmem_est, 32 << 20), 64 << 20))

    kernel = functools.partial(_ce_kernel, n=n, hw=hw)

    partials = pl.pallas_call(
        kernel,
        out_shape=jax.ShapeDtypeStruct((grid_n, grid_p, 8, 128), jnp.float32),
        grid_spec=pltpu.PrefetchScalarGridSpec(
            num_scalar_prefetch=0,
            grid=(grid_n, grid_p),
            in_specs=[
                pl.BlockSpec((tile_n, c, tile_sub, 128), lambda i, j: (i, 0, j, 0)),
                pl.BlockSpec((tile_n, c, tile_sub, 128), lambda i, j: (i, 0, j, 0)),
                pl.BlockSpec((1, c, 1, 128), lambda i, j: (0, 0, 0, 0)),
            ],
            out_specs=pl.BlockSpec((1, 1, 8, 128), lambda i, j: (i, j, 0, 0)),
        ),
        compiler_params=pltpu.CompilerParams(
            dimension_semantics=("parallel", "parallel"),
            vmem_limit_bytes=vmem_limit,
        ),
    )(x, t, w_rep)

    loss_sum = jnp.sum(partials[:, :, 0, 0])
    w_sum = jnp.sum(partials[:, :, 1, 0])
    return loss_sum / w_sum


def _reference(logits_nchw, target_nchw, weight):
    # pure-JAX reference of nn.CrossEntropyLoss(weight)(x, target.argmax(1))
    t_idx = jnp.argmax(target_nchw, axis=1)                              # [N,H,W]
    logp = jax.nn.log_softmax(logits_nchw.astype(jnp.float32), axis=1)
    nll = -jnp.take_along_axis(logp, t_idx[:, None], axis=1)[:, 0]       # [N,H,W]
    if weight is None:
        return jnp.mean(nll)
    w = jnp.asarray(weight, jnp.float32)[t_idx]
    return jnp.sum(w * nll) / jnp.sum(w)


if __name__ == "__main__":
    key = jax.random.PRNGKey(0)
    k1, k2, k3, k4, k5, k6, k7, k8 = jax.random.split(key, 8)

    # primary shapes consistent with the module
    N, C, H, W = 2, 4, 16, 16
    logits = jax.random.normal(k1, (N, C, H, W), dtype=jnp.float32)
    target = jax.random.uniform(k2, (N, C, H, W), dtype=jnp.float32)
    class_weight = jnp.array([0.5, 1.0, 1.5, 2.0], dtype=jnp.float32)

    # weighted path
    loss = jax.block_until_ready(ce_with_logits_loss(logits, target, weight=class_weight))
    ref = _reference(logits, target, class_weight)
    assert jnp.allclose(loss, ref, rtol=1e-5, atol=1e-5), (loss, ref)

    # weight=None (plain mean) path
    loss_nw = jax.block_until_ready(ce_with_logits_loss(logits, target, weight=None))
    ref_nw = _reference(logits, target, None)
    assert jnp.allclose(loss_nw, ref_nw, rtol=1e-5, atol=1e-5), (loss_nw, ref_nw)

    # bf16 inputs stream through in native dtype (no wrapper upcast)
    loss_bf = jax.block_until_ready(
        ce_with_logits_loss(logits.astype(jnp.bfloat16), target, weight=class_weight))
    ref_bf = _reference(logits.astype(jnp.bfloat16), target, class_weight)
    assert jnp.allclose(loss_bf, ref_bf, rtol=1e-4, atol=1e-4), (loss_bf, ref_bf)

    # ragged HW (not a multiple of 128) + odd class count -> wrapper pad + mask
    N2, C2, H2, W2 = 1, 3, 10, 20                      # HW = 200
    logits2 = jax.random.normal(k3, (N2, C2, H2, W2), dtype=jnp.float32)
    target2 = jax.random.uniform(k4, (N2, C2, H2, W2), dtype=jnp.float32)
    w2 = jnp.array([1.0, 2.0, 0.5], dtype=jnp.float32)
    loss2 = jax.block_until_ready(ce_with_logits_loss(logits2, target2, weight=w2))
    ref2 = _reference(logits2, target2, w2)
    assert jnp.allclose(loss2, ref2, rtol=1e-5, atol=1e-5), (loss2, ref2)

    # batch tiling with a ragged batch tail (N=3, tile_n=2 after the >=2-step fix)
    N3, C3, H3, W3 = 3, 4, 8, 8                        # HW = 64 (< one lane row)
    logits3 = jax.random.normal(k5, (N3, C3, H3, W3), dtype=jnp.float32)
    target3 = jax.random.uniform(k6, (N3, C3, H3, W3), dtype=jnp.float32)
    loss3 = jax.block_until_ready(ce_with_logits_loss(logits3, target3, weight=None))
    ref3 = _reference(logits3, target3, None)
    assert jnp.allclose(loss3, ref3, rtol=1e-5, atol=1e-5), (loss3, ref3)

    # force the pixel-sublane tiling path with a ragged last pixel tile
    N4, C4, H4, W4 = 1, 3, 48, 48                      # HW = 2304, P_sub = 18
    logits4 = jax.random.normal(k7, (N4, C4, H4, W4), dtype=jnp.float32)
    target4 = jax.random.uniform(k8, (N4, C4, H4, W4), dtype=jnp.float32)
    loss4 = jax.block_until_ready(
        ce_with_logits_loss(logits4, target4, weight=w2,
                            target_block_elems=3 * 8 * 128))
    ref4 = _reference(logits4, target4, w2)
    assert jnp.allclose(loss4, ref4, rtol=1e-5, atol=1e-5), (loss4, ref4)

    print("KERNEL_OK")
</pallas_src>

<mosaic_0001>
module attributes {stable_mosaic.version = 11 : i64} {
  func.func @_ce_kernel(%arg0: i32, %arg1: i32, %arg2: memref<1x4x2x128xf32, #tpu.memory_space<vmem>>, %arg3: memref<1x4x2x128xf32, #tpu.memory_space<vmem>>, %arg4: memref<1x4x1x128xf32, #tpu.memory_space<vmem>>, %arg5: memref<1x1x8x128xf32, #tpu.memory_space<vmem>>) attributes {dimension_semantics = [#tpu.dimension_semantics<parallel>, #tpu.dimension_semantics<parallel>], iteration_bounds = array<i64: 2, 1>, scalar_prefetch = 0 : i64, scratch_operands = 0 : i64, tpu.core_type = #tpu.core_type<tc>, window_params = [{transform_indices = @transform_0, window_bounds = array<i64: 1, 4, 2, 128>}, {transform_indices = @transform_1, window_bounds = array<i64: 1, 4, 2, 128>}, {pipeline_mode = #tpu.pipeline_mode<synchronous>, transform_indices = @transform_2, window_bounds = array<i64: 1, 4, 1, 128>}, {transform_indices = @transform_3, window_bounds = array<i64: 1, 1, 8, 128>}]} {
    %c0 = arith.constant 0 : index
    %c0_0 = arith.constant 0 : index
    %c0_1 = arith.constant 0 : index
    %c0_2 = arith.constant 0 : index
    %0 = vector.load %arg2[%c0, %c0_0, %c0_1, %c0_2] : memref<1x4x2x128xf32, #tpu.memory_space<vmem>>, vector<1x4x2x128xf32>
    %c0_3 = arith.constant 0 : index
    %c0_4 = arith.constant 0 : index
    %c0_5 = arith.constant 0 : index
    %c0_6 = arith.constant 0 : index
    %1 = vector.load %arg3[%c0_3, %c0_4, %c0_5, %c0_6] : memref<1x4x2x128xf32, #tpu.memory_space<vmem>>, vector<1x4x2x128xf32>
    %c0_7 = arith.constant 0 : index
    %c0_8 = arith.constant 0 : index
    %c0_9 = arith.constant 0 : index
    %c0_10 = arith.constant 0 : index
    %2 = vector.load %arg4[%c0_7, %c0_8, %c0_9, %c0_10] : memref<1x4x1x128xf32, #tpu.memory_space<vmem>>, vector<1x4x1x128xf32>
    %3 = tpu.iota {dimensions = array<i32: 1>} : vector<1x4x2x128xi32>
    %cst = arith.constant dense<0xFF800000> : vector<1x2x128xf32>
    %4 = vector.multi_reduction <maximumf>, %1, %cst [1] : vector<1x4x2x128xf32> to vector<1x2x128xf32>
    %5 = vector.shape_cast %4 : vector<1x2x128xf32> to vector<1x1x2x128xf32>
    %6 = vector.broadcast %5 : vector<1x1x2x128xf32> to vector<1x4x2x128xf32>
    %7 = arith.cmpf oge, %1, %6 : vector<1x4x2x128xf32>
    %c4_i32 = arith.constant 4 : i32
    %8 = vector.broadcast %c4_i32 : i32 to vector<1x4x2x128xi32>
    %9 = arith.select %7, %3, %8 : vector<1x4x2x128xi1>, vector<1x4x2x128xi32>
    %cst_11 = arith.constant dense<2147483647> : vector<1x2x128xi32>
    %10 = vector.multi_reduction <minsi>, %9, %cst_11 [1] : vector<1x4x2x128xi32> to vector<1x2x128xi32>
    %11 = vector.shape_cast %10 : vector<1x2x128xi32> to vector<1x1x2x128xi32>
    %12 = vector.broadcast %11 : vector<1x1x2x128xi32> to vector<1x4x2x128xi32>
    %13 = arith.cmpi eq, %3, %12 : vector<1x4x2x128xi32>
    %14 = arith.extui %13 : vector<1x4x2x128xi1> to vector<1x4x2x128xi32>
    %15 = arith.sitofp %14 : vector<1x4x2x128xi32> to vector<1x4x2x128xf32>
    %cst_12 = arith.constant dense<0xFF800000> : vector<1x2x128xf32>
    %16 = vector.multi_reduction <maximumf>, %0, %cst_12 [1] : vector<1x4x2x128xf32> to vector<1x2x128xf32>
    %17 = vector.shape_cast %16 : vector<1x2x128xf32> to vector<1x1x2x128xf32>
    %18 = vector.broadcast %17 : vector<1x1x2x128xf32> to vector<1x4x2x128xf32>
    %19 = arith.subf %0, %18 : vector<1x4x2x128xf32>
    %20 = math.exp %19 : vector<1x4x2x128xf32>
    %cst_13 = arith.constant dense<0.000000e+00> : vector<1x2x128xf32>
    %21 = vector.multi_reduction <add>, %20, %cst_13 [1] : vector<1x4x2x128xf32> to vector<1x2x128xf32>
    %22 = vector.shape_cast %21 : vector<1x2x128xf32> to vector<1x1x2x128xf32>
    %23 = math.log %22 : vector<1x1x2x128xf32>
    %24 = arith.addf %23, %17 : vector<1x1x2x128xf32>
    %25 = arith.mulf %0, %15 : vector<1x4x2x128xf32>
    %cst_14 = arith.constant dense<0.000000e+00> : vector<1x2x128xf32>
    %26 = vector.multi_reduction <add>, %25, %cst_14 [1] : vector<1x4x2x128xf32> to vector<1x2x128xf32>
    %27 = vector.shape_cast %26 : vector<1x2x128xf32> to vector<1x1x2x128xf32>
    %28 = arith.subf %24, %27 : vector<1x1x2x128xf32>
    %29 = vector.shape_cast %28 : vector<1x1x2x128xf32> to vector<1x2x128xf32>
    %30 = vector.broadcast %2 : vector<1x4x1x128xf32> to vector<1x4x2x128xf32>
    %31 = arith.mulf %30, %15 : vector<1x4x2x128xf32>
    %cst_15 = arith.constant dense<0.000000e+00> : vector<1x2x128xf32>
    %32 = vector.multi_reduction <add>, %31, %cst_15 [1] : vector<1x4x2x128xf32> to vector<1x2x128xf32>
    %33 = tpu.iota {dimensions = array<i32: 0>} : vector<1x2x128xi32>
    %c1_i32 = arith.constant 1 : i32
    %34 = arith.muli %arg0, %c1_i32 : i32
    %35 = vector.broadcast %34 : i32 to vector<1x2x128xi32>
    %36 = arith.addi %33, %35 : vector<1x2x128xi32>
    %37 = tpu.iota {dimensions = array<i32: 1>} : vector<1x2x128xi32>
    %38 = tpu.iota {dimensions = array<i32: 2>} : vector<1x2x128xi32>
    %c2_i32 = arith.constant 2 : i32
    %39 = arith.muli %arg1, %c2_i32 : i32
    %40 = vector.broadcast %39 : i32 to vector<1x2x128xi32>
    %41 = arith.addi %40, %37 : vector<1x2x128xi32>
    %c128_i32 = arith.constant 128 : i32
    %42 = vector.broadcast %c128_i32 : i32 to vector<1x2x128xi32>
    %43 = arith.muli %41, %42 : vector<1x2x128xi32>
    %44 = arith.addi %43, %38 : vector<1x2x128xi32>
    %c2_i32_16 = arith.constant 2 : i32
    %45 = vector.broadcast %c2_i32_16 : i32 to vector<1x2x128xi32>
    %46 = arith.cmpi slt, %36, %45 : vector<1x2x128xi32>
    %c256_i32 = arith.constant 256 : i32
    %47 = vector.broadcast %c256_i32 : i32 to vector<1x2x128xi32>
    %48 = arith.cmpi slt, %44, %47 : vector<1x2x128xi32>
    %49 = arith.andi %46, %48 : vector<1x2x128xi1>
    %50 = arith.mulf %29, %32 : vector<1x2x128xf32>
    %cst_17 = arith.constant 0.000000e+00 : f32
    %51 = vector.broadcast %cst_17 : f32 to vector<1x2x128xf32>
    %52 = arith.select %49, %50, %51 : vector<1x2x128xi1>, vector<1x2x128xf32>
    %53 = vector.shape_cast %52 : vector<1x2x128xf32> to vector<1x1x2x128xf32>
    %cst_18 = arith.constant dense<0.000000e+00> : vector<1xf32>
    %54 = vector.multi_reduction <add>, %53, %cst_18 [1, 2, 3] : vector<1x1x2x128xf32> to vector<1xf32>
    %55 = vector.shape_cast %54 : vector<1xf32> to vector<1x1x1x1xf32>
    %56 = vector.extract %55[0, 0, 0, 0] : f32 from vector<1x1x1x1xf32>
    %cst_19 = arith.constant 0.000000e+00 : f32
    %57 = vector.broadcast %cst_19 : f32 to vector<1x2x128xf32>
    %58 = arith.select %49, %32, %57 : vector<1x2x128xi1>, vector<1x2x128xf32>
    %59 = vector.shape_cast %58 : vector<1x2x128xf32> to vector<1x1x2x128xf32>
    %cst_20 = arith.constant dense<0.000000e+00> : vector<1xf32>
    %60 = vector.multi_reduction <add>, %59, %cst_20 [1, 2, 3] : vector<1x1x2x128xf32> to vector<1xf32>
    %61 = vector.shape_cast %60 : vector<1xf32> to vector<1x1x1x1xf32>
    %62 = vector.extract %61[0, 0, 0, 0] : f32 from vector<1x1x1x1xf32>
    %63 = tpu.iota {dimensions = array<i32: 0>} : vector<8x128xi32>
    %64 = tpu.iota {dimensions = array<i32: 1>} : vector<8x128xi32>
    %c0_i32 = arith.constant 0 : i32
    %65 = vector.broadcast %c0_i32 : i32 to vector<8x128xi32>
    %66 = arith.cmpi eq, %64, %65 : vector<8x128xi32>
    %c0_i32_21 = arith.constant 0 : i32
    %67 = vector.broadcast %c0_i32_21 : i32 to vector<8x128xi32>
    %68 = arith.cmpi eq, %63, %67 : vector<8x128xi32>
    %c1_i32_22 = arith.constant 1 : i32
    %69 = vector.broadcast %c1_i32_22 : i32 to vector<8x128xi32>
    %70 = arith.cmpi eq, %63, %69 : vector<8x128xi32>
    %cst_23 = arith.constant 0.000000e+00 : f32
    %71 = vector.broadcast %62 : f32 to vector<8x128xf32>
    %72 = vector.broadcast %cst_23 : f32 to vector<8x128xf32>
    %73 = arith.select %70, %71, %72 : vector<8x128xi1>, vector<8x128xf32>
    %74 = vector.broadcast %56 : f32 to vector<8x128xf32>
    %75 = arith.select %68, %74, %73 : vector<8x128xi1>, vector<8x128xf32>
    %cst_24 = arith.constant 0.000000e+00 : f32
    %76 = vector.broadcast %cst_24 : f32 to vector<8x128xf32>
    %77 = arith.select %66, %75, %76 : vector<8x128xi1>, vector<8x128xf32>
    %78 = vector.shape_cast %77 : vector<8x128xf32> to vector<1x1x8x128xf32>
    %c0_25 = arith.constant 0 : index
    %c0_26 = arith.constant 0 : index
    %c0_27 = arith.constant 0 : index
    %c0_28 = arith.constant 0 : index
    %79 = vector.load %arg5[%c0_25, %c0_26, %c0_27, %c0_28] : memref<1x1x8x128xf32, #tpu.memory_space<vmem>>, vector<1x1x8x128xf32>
    tpu.vector_store %arg5[%c0_25, %c0_26, %c0_27, %c0_28], %78 {strides = array<i32>} : memref<1x1x8x128xf32, #tpu.memory_space<vmem>>, vector<1x1x8x128xf32>,
    return
  }
  func.func @transform_0(%arg0: i32, %arg1: i32) -> (i32, i32, i32, i32) {
    %c0_i32 = arith.constant 0 : i32
    %c0_i32_0 = arith.constant 0 : i32
    %c0_i32_1 = arith.constant 0 : i32
    return %arg0, %c0_i32, %arg1, %c0_i32_0 : i32, i32, i32, i32
  }
  func.func @transform_1(%arg0: i32, %arg1: i32) -> (i32, i32, i32, i32) {
    %c0_i32 = arith.constant 0 : i32
    %c0_i32_0 = arith.constant 0 : i32
    %c0_i32_1 = arith.constant 0 : i32
    return %arg0, %c0_i32, %arg1, %c0_i32_0 : i32, i32, i32, i32
  }
  func.func @transform_2(%arg0: i32, %arg1: i32) -> (i32, i32, i32, i32) {
    %c0_i32 = arith.constant 0 : i32
    %c0_i32_0 = arith.constant 0 : i32
    %c0_i32_1 = arith.constant 0 : i32
    %c0_i32_2 = arith.constant 0 : i32
    %c0_i32_3 = arith.constant 0 : i32
    return %c0_i32, %c0_i32_0, %c0_i32_1, %c0_i32_2 : i32, i32, i32, i32
  }
  func.func @transform_3(%arg0: i32, %arg1: i32) -> (i32, i32, i32, i32) {
    %c0_i32 = arith.constant 0 : i32
    %c0_i32_0 = arith.constant 0 : i32
    %c0_i32_1 = arith.constant 0 : i32
    return %arg0, %arg1, %c0_i32, %c0_i32_0 : i32, i32, i32, i32
  }
}

</mosaic_0001>

<llo_original>
// kernel: tpu_custom_call.1
$region0: #{tpu_custom_call.1}
  #allocation0 [shape = 'u32[]', space=smem, size = 0x4, offset = 0x4, fixed_abs, tag = 'smem constant byte address 0x4 - core index']
  #allocation1 [shape = 'u32[144,128]{1,0:T(1,128)}', space=vmem, size = 0x12000, scoped, tag = 'internal scratch']
  %s0 = inlined_call_operand.hbm [shape: f32[2,4,2,128], index: 0, kind: input, shape index: {}]
  %s1 = inlined_call_operand.hbm [shape: f32[2,4,2,128], index: 1, kind: input, shape index: {}]
  %s2 = inlined_call_operand.vmem [shape: f32[1,4,1,128], index: 2, kind: input, shape index: {}]
  %s3 = inlined_call_operand.hbm [shape: f32[2,1,8,128], index: 3, kind: output, shape index: {}]
  %s4 = sld [smem:[#allocation0]]
  $region53: #{tpu_custom_call.1} parent=0
    _
  %s6 = ssub.s32 1, %s4
  %s7 = scalar_select 0, %s6, %s4
  $region1: #{tpu_custom_call.1} parent=0
    #allocation2 [shape = 'u8[8192]{0}', space=vmem, size = 0x2000, scoped, tag = 'input window, operand 0']
    #allocation3 [shape = 's32[2]{0}', space=sflag, size = 0x8, scoped, tag = 'scoped memory for tpu_custom_call.1']
    #allocation4 [shape = 's32[2]{0}', space=sflag, size = 0x8, scoped, tag = 'scoped memory for tpu_custom_call.1']
    #allocation5 [shape = 'u8[8192]{0}', space=vmem, size = 0x2000, scoped, tag = 'input window, operand 1']
    #allocation6 [shape = 's32[2]{0}', space=sflag, size = 0x8, scoped, tag = 'scoped memory for tpu_custom_call.1']
    #allocation7 [shape = 'u8[8192]{0}', space=vmem, size = 0x2000, scoped, tag = 'output window, operand 0']
    %8 = vsyncpa [#allocation3], 0
    %s9 = scalar_lea.sflag [#allocation3], 1
    %10 = vsyncpa %s9, 0
    %11 = vsyncpa [#allocation6], 0
    %s12 = scalar_lea.sflag [#allocation6], 1
    %13 = vsyncpa %s12, 0
    %14 = vsyncpa [#allocation4], 0
    %s15 = scalar_lea.sflag [#allocation4], 1
    %16 = vsyncpa %s15, 0
    loop: start=0, step=1, limit=4
    $region2: #{tpu_custom_call.1} parent=1 // loop_pre_header
      _
    $region3: #{tpu_custom_call.1} parent=1 // loop_header
      %s18 = sphi 0, %s22
      %p19 = scmp.ge.s32.totalorder %s18, 4
      %s25 = sphi 0, %s37
      %s26 = sphi 0, %s33
      %s27 = sphi 0, %s25
      %s28 = sphi 0, %s26
      %s29 = sphi 0, %s27
      %s30 = sphi 0, %s28
      %s42 = sphi 0, %s44
      %s45 = sphi 0, %s42
      %s46 = sphi 0, %s45
      %s62 = sphi 0, %s46
      %s70 = sphi 0, %s72
      %s73 = sphi 0, %s70
      %s74 = sphi 0, %s73
      %s90 = sphi 0, %s74
      %s94 = sphi 0, %s94
      %s96 = sphi 0, %s94
      %s97 = sphi 0, %s96
      %s111 = sphi 0, %s97
      %s119 = sphi 0, %s121
      %s122 = sphi 0, %s119
      %s123 = sphi 0, %s122
      %s139 = sphi 0, %s123
    $region4: #{tpu_custom_call.1} parent=1 // loop_header_branch
      %21 = sbr.rel (%p19) target = $region8
    $region5: #{tpu_custom_call.1} parent=1 // loop_body
      %s23 = ssub.s32 %s18, 1
      %s24 = ssub.s32 %s18, 2
      %s31 = sadd.s32 1, %s26
      %p32 = scmp.ge.s32.totalorder %s31, 1
      %s33 = scalar_select %p32, 0, %s31
      %s34 = sadd.s32 1, %s25
      %s35 = scalar_select %p32, %s34, %s25
      %p36 = scmp.ge.s32.totalorder %s35, 2
      %s37 = scalar_select %p36, 0, %s35
      %s38 = ssub.s32 %s25, %s37
      %s39 = ssub.s32 %s26, %s33
      %s40 = sor.u32 %s38, %s39
      %p41 = scmp.eq.s32.totalorder %s40, 0
      %s43 = sadd.s32 %s42, 1
      %s44 = scalar_select %p41, %s42, %s43
      %p47 = pneg %p41
      %p48 = scmp.eq.s32.totalorder %s18, 1
      %p49 = por %p47, %p48
      %p50 = scmp.ne.s32.totalorder %s42, %s45
      %p51 = scmp.eq.s32.totalorder %s18, 0
      %p52 = por %p50, %p51
      %p53 = scmp.ne.s32.totalorder %s42, %s45
      %p54 = scmp.eq.s32.totalorder %s23, 1
      %p55 = por %p53, %p54
      %p56 = scmp.ne.s32.totalorder %s45, %s46
      %p57 = scmp.eq.s32.totalorder %s23, 0
      %p58 = por %p56, %p57
      %p59 = scmp.ne.s32.totalorder %s45, %s46
      %p60 = scmp.eq.s32.totalorder %s24, 1
      %p61 = por %p59, %p60
      %p63 = scmp.ne.s32.totalorder %s46, %s62
      %p64 = scmp.eq.s32.totalorder %s24, 0
      %p65 = por %p63, %p64
      %s66 = ssub.s32 %s25, %s37
      %s67 = ssub.s32 %s26, %s33
      %s68 = sor.u32 %s66, %s67
      %p69 = scmp.eq.s32.totalorder %s68, 0
      %s71 = sadd.s32 %s70, 1
      %s72 = scalar_select %p69, %s70, %s71
      %p75 = pneg %p69
      %p76 = scmp.eq.s32.totalorder %s18, 1
      %p77 = por %p75, %p76
      %p78 = scmp.ne.s32.totalorder %s70, %s73
      %p79 = scmp.eq.s32.totalorder %s18, 0
      %p80 = por %p78, %p79
      %p81 = scmp.ne.s32.totalorder %s70, %s73
      %p82 = scmp.eq.s32.totalorder %s23, 1
      %p83 = por %p81, %p82
      %p84 = scmp.ne.s32.totalorder %s73, %s74
      %p85 = scmp.eq.s32.totalorder %s23, 0
      %p86 = por %p84, %p85
      %p87 = scmp.ne.s32.totalorder %s73, %s74
      %p88 = scmp.eq.s32.totalorder %s24, 1
      %p89 = por %p87, %p88
      %p91 = scmp.ne.s32.totalorder %s74, %s90
      %p92 = scmp.eq.s32.totalorder %s24, 0
      %p93 = por %p91, %p92
      %s95 = sadd.s32 %s94, 1
      %p98 = scmp.eq.s32.totalorder %s18, 1
      %p99 = scmp.ne.s32.totalorder %s94, %s96
      %p100 = scmp.eq.s32.totalorder %s18, 0
      %p101 = por %p99, %p100
      %p102 = scmp.ne.s32.totalorder %s94, %s96
      %p103 = scmp.eq.s32.totalorder %s23, 1
      %p104 = por %p102, %p103
      %p105 = scmp.ne.s32.totalorder %s96, %s97
      %p106 = scmp.eq.s32.totalorder %s23, 0
      %p107 = por %p105, %p106
      %p108 = scmp.ne.s32.totalorder %s96, %s97
      %p109 = scmp.eq.s32.totalorder %s24, 1
      %p110 = por %p108, %p109
      %p112 = scmp.ne.s32.totalorder %s97, %s111
      %p113 = scmp.eq.s32.totalorder %s24, 0
      %p114 = por %p112, %p113
      %s115 = ssub.s32 %s25, %s37
      %s116 = ssub.s32 %s26, %s33
      %s117 = sor.u32 %s115, %s116
      %p118 = scmp.eq.s32.totalorder %s117, 0
      %s120 = sadd.s32 %s119, 1
      %s121 = scalar_select %p118, %s119, %s120
      %p124 = pneg %p118
      %p125 = scmp.eq.s32.totalorder %s18, 1
      %p126 = por %p124, %p125
      %p127 = scmp.ne.s32.totalorder %s119, %s122
      %p128 = scmp.eq.s32.totalorder %s18, 0
      %p129 = por %p127, %p128
      %p130 = scmp.ne.s32.totalorder %s119, %s122
      %p131 = scmp.eq.s32.totalorder %s23, 1
      %p132 = por %p130, %p131
      %p133 = scmp.ne.s32.totalorder %s122, %s123
      %p134 = scmp.eq.s32.totalorder %s23, 0
      %p135 = por %p133, %p134
      %p136 = scmp.ne.s32.totalorder %s122, %s123
      %p137 = scmp.eq.s32.totalorder %s24, 1
      %p138 = por %p136, %p137
      %p140 = scmp.ne.s32.totalorder %s123, %s139
      %p141 = scmp.eq.s32.totalorder %s24, 0
      %p142 = por %p140, %p141
      %p143 = scmp.le.s32.totalorder 1, %s18
      %p144 = scmp.lt.s32.totalorder %s18, 3
      %p145 = pnand %p143, %p144
      %p146 = pneg %p145
      // Predicated region
      $region9: #{tpu_custom_call.1} parent=5 // pred_check
        _
      $region10: #{tpu_custom_call.1} parent=5 // pred_check_branch
        %148 = sbr.rel (%p145) target = $region12
      $region11: #{tpu_custom_call.1} parent=5 // pred_region
        %s149 = ssub.s32 %s18, 1
        // Predicated region
        $region13: #{tpu_custom_call.1} parent=11 // pred_check
          %p150 = pneg %p107
        $region14: #{tpu_custom_call.1} parent=11 // pred_check_branch
          %152 = sbr.rel (%p150) target = $region16
        $region15: #{tpu_custom_call.1} parent=11 // pred_region
          _
        $region16: #{tpu_custom_call.1} parent=11 // pred_fallthru
          _
      $region12: #{tpu_custom_call.1} parent=5 // pred_fallthru
        _
      %p153 = scmp.lt.s32.totalorder %s18, 2
      // Predicated region
      $region17: #{tpu_custom_call.1} parent=5 // pred_check
        %p154 = pneg %p153
      $region18: #{tpu_custom_call.1} parent=5 // pred_check_branch
        %156 = sbr.rel (%p154) target = $region20
      $region19: #{tpu_custom_call.1} parent=5 // pred_region
        // Predicated region
        $region21: #{tpu_custom_call.1} parent=19 // pred_check
          %p157 = pneg %p52
        $region22: #{tpu_custom_call.1} parent=19 // pred_check_branch
          %159 = sbr.rel (%p157) target = $region24
        $region23: #{tpu_custom_call.1} parent=19 // pred_region
          %s160 = sand.u32 %s42, 1
          %s161 = scalar_lea.sflag [#allocation3], %s160
          %s162 = sand.u32 %s42, 1
          %s163 = smul.addr %s162, 8
          %s164 = scalar_lea.vmem [#allocation2], %s163
          %s166 = ssub.s32 128, 128
          %167 = vsyncadd %s161, %s166
          %s168 = smul.addr %s25, 4
          %s169 = sadd.s32 %s26, %s168
          %s170 = smul.addr %s169, 32
          %s171 = scalar_lea.hbm %s0, %s170
          %s172 = sshll.u32 %s164, 4
          %s173 = int_to_ptr.vmem [resolvable:$true] %s172
          %178 = dma.hbm_to_vmem [thread:$0]  %s171, 128, %s173, %s161, 32, 32, 2
        $region24: #{tpu_custom_call.1} parent=19 // pred_fallthru
          _
        // Predicated region
        $region25: #{tpu_custom_call.1} parent=19 // pred_check
          %p179 = pneg %p80
        $region26: #{tpu_custom_call.1} parent=19 // pred_check_branch
          %181 = sbr.rel (%p179) target = $region28
        $region27: #{tpu_custom_call.1} parent=19 // pred_region
          %s182 = sand.u32 %s70, 1
          %s183 = scalar_lea.sflag [#allocation6], %s182
          %s184 = sand.u32 %s70, 1
          %s185 = smul.addr %s184, 8
          %s186 = scalar_lea.vmem [#allocation5], %s185
          %s188 = ssub.s32 128, 128
          %189 = vsyncadd %s183, %s188
          %s190 = smul.addr %s25, 4
          %s191 = sadd.s32 %s26, %s190
          %s192 = smul.addr %s191, 32
          %s193 = scalar_lea.hbm %s1, %s192
          %s194 = sshll.u32 %s186, 4
          %s195 = int_to_ptr.vmem [resolvable:$true] %s194
          %200 = dma.hbm_to_vmem [thread:$0]  %s193, 128, %s195, %s183, 32, 32, 2
        $region28: #{tpu_custom_call.1} parent=19 // pred_fallthru
          _
      $region20: #{tpu_custom_call.1} parent=5 // pred_fallthru
        _
      %p201 = scmp.le.s32.totalorder 1, %s18
      %p202 = scmp.lt.s32.totalorder %s18, 3
      %p203 = pnand %p201, %p202
      %p204 = pneg %p203
      // Predicated region
      $region29: #{tpu_custom_call.1} parent=5 // pred_check
        _
      $region30: #{tpu_custom_call.1} parent=5 // pred_check_branch
        %206 = sbr.rel (%p203) target = $region32
      $region31: #{tpu_custom_call.1} parent=5 // pred_region
        %s207 = ssub.s32 %s18, 1
        %s208 = sand.u32 %s45, 1
        %s209 = scalar_lea.sflag [#allocation3], %s208
        %s210 = sand.u32 %s45, 1
        %s211 = smul.addr %s210, 8
        %s212 = scalar_lea.vmem [#allocation2], %s211
        // Predicated region
        $region33: #{tpu_custom_call.1} parent=31 // pred_check
          %p213 = pneg %p58
        $region34: #{tpu_custom_call.1} parent=31 // pred_check_branch
          %215 = sbr.rel (%p213) target = $region36
        $region35: #{tpu_custom_call.1} parent=31 // pred_region
          %216 = dma.done %s209, 128
        $region36: #{tpu_custom_call.1} parent=31 // pred_fallthru
          _
        %s217 = sand.u32 %s73, 1
        %s218 = scalar_lea.sflag [#allocation6], %s217
        %s219 = sand.u32 %s73, 1
        %s220 = smul.addr %s219, 8
        %s221 = scalar_lea.vmem [#allocation5], %s220
        // Predicated region
        $region37: #{tpu_custom_call.1} parent=31 // pred_check
          %p222 = pneg %p86
        $region38: #{tpu_custom_call.1} parent=31 // pred_check_branch
          %224 = sbr.rel (%p222) target = $region40
        $region39: #{tpu_custom_call.1} parent=31 // pred_region
          %225 = dma.done %s218, 128
        $region40: #{tpu_custom_call.1} parent=31 // pred_fallthru
          _
        %s226 = sand.u32 %s45, 1
        %s227 = scalar_lea.sflag [#allocation3], %s226
        %s228 = sand.u32 %s45, 1
        %s229 = smul.addr %s228, 8
        %s230 = scalar_lea.vmem [#allocation2], %s229
        %p231 = pneg %p58
        %p232 = pneg %p55
        %s233 = sand.u32 %s73, 1
        %s234 = scalar_lea.sflag [#allocation6], %s233
        %s235 = sand.u32 %s73, 1
        %s236 = smul.addr %s235, 8
        %s237 = scalar_lea.vmem [#allocation5], %s236
        %p238 = pneg %p86
        %p239 = pneg %p83
        %p240 = pneg %p107
        %p241 = pneg %p104
        %p242 = pneg %p135
        %p243 = pneg %p132
        %s244 = sand.u32 %s122, 1
        %s245 = scalar_lea.sflag [#allocation4], %s244
        %s246 = sand.u32 %s122, 1
        %s247 = smul.addr %s246, 8
        %s248 = scalar_lea.vmem [#allocation7], %s247
        %v249 = vld [vmem:[%s212] sm:$0x3]
        %v250 = vld [vmem:[%s212 + $0x2] sm:$0x3]
        %v251 = vld [vmem:[%s212 + $0x4] sm:$0x3]
        %v252 = vld [vmem:[%s212 + $0x6] sm:$0x3]
        %v253 = vld [vmem:[%s221] sm:$0x3]
        %v254 = vld [vmem:[%s221 + $0x2] sm:$0x3]
        %v255 = vld [vmem:[%s221 + $0x4] sm:$0x3]
        %v256 = vld [vmem:[%s221 + $0x6] sm:$0x3]
        %v257 = vld [vmem:[%s2] sm:$0x1]
        %v258 = vld [vmem:[%s2 + $0x1] sm:$0x1]
        %v259 = vld [vmem:[%s2 + $0x2] sm:$0x1]
        %v260 = vld [vmem:[%s2 + $0x3] sm:$0x1]
        %vm261 = vcmask 1041408
        %v262 = vsel %vm261, %v253, -inf
        %v263 = vsel %vm261, %v254, -inf
        %v264 = vsel %vm261, %v255, -inf
        %v265 = vsel %vm261, %v256, -inf
        %v266 = vmax.f32 %v262, %v263
        %v267 = vmax.f32 %v264, %v265
        %v268 = vmax.f32 %v266, %v267
        %vm269 = vcmp.ge.f32.partialorder %v253, %v268
        %vm270 = vcmp.ge.f32.partialorder %v254, %v268
        %vm271 = vcmp.ge.f32.partialorder %v255, %v268
        %vm272 = vcmp.ge.f32.partialorder %v256, %v268
        %v273 = vsel %vm269, 0, 4
        %v274 = vsel %vm270, 1, 4
        %v275 = vsel %vm271, 2, 4
        %v276 = vsel %vm272, 3, 4
        %v277 = vsel %vm261, %v273, 2147483647
        %v278 = vsel %vm261, %v274, 2147483647
        %v279 = vsel %vm261, %v275, 2147483647
        %v280 = vsel %vm261, %v276, 2147483647
        %vm281 = vcmp.lt.s32.totalorder %v277, %v278
        %v282 = vsel %vm281, %v277, %v278
        %vm283 = vcmp.lt.s32.totalorder %v279, %v280
        %v284 = vsel %vm283, %v279, %v280
        %vm285 = vcmp.lt.s32.totalorder %v282, %v284
        %v286 = vsel %vm285, %v282, %v284
        %vm287 = vcmp.eq.s32.totalorder %v286, 0
        %vm288 = vcmp.eq.s32.totalorder %v286, 1
        %vm289 = vcmp.eq.s32.totalorder %v286, 2
        %vm290 = vcmp.eq.s32.totalorder %v286, 3
        %v291 = vsel %vm287, 1, 0
        %v292 = vsel %vm288, 1, 0
        %v293 = vsel %vm289, 1, 0
        %v294 = vsel %vm290, 1, 0
        %v295 = vcvt.s32.f32 %v291
        %v296 = vcvt.s32.f32 %v292
        %v297 = vcvt.s32.f32 %v293
        %v298 = vcvt.s32.f32 %v294
        %v299 = vsel %vm261, %v249, -inf
        %v300 = vsel %vm261, %v250, -inf
        %v301 = vsel %vm261, %v251, -inf
        %v302 = vsel %vm261, %v252, -inf
        %v303 = vmax.f32 %v299, %v300
        %v304 = vmax.f32 %v301, %v302
        %v305 = vmax.f32 %v303, %v304
        %v306 = vsub.f32 %v249, %v305
        %v307 = vsub.f32 %v250, %v305
        %v308 = vsub.f32 %v251, %v305
        %v309 = vsub.f32 %v252, %v305
        %v310 = vmul.f32 %v306, 1.442695
        %v311 = vpow.pop %v310
        %v312 = vmul.f32 %v307, 1.442695
        %v313 = vpow.pop %v312
        %v314 = vmul.f32 %v308, 1.442695
        %v315 = vpow.pop %v314
        %v316 = vmul.f32 %v309, 1.442695
        %v317 = vpow.pop %v316
        %v318 = vsel %vm261, %v311, 0.0
        %v319 = vsel %vm261, %v313, 0.0
        %v320 = vadd.f32 %v318, %v319
        %v321 = vsel %vm261, %v315, 0.0
        %v322 = vadd.f32 %v320, %v321
        %v323 = vsel %vm261, %v317, 0.0
        %v324 = vadd.f32 %v322, %v323
        %v325 = vlog2.pop %v324
        %v326 = vmul.f32 %v325, 0.6931472
        %v327 = vadd.f32 %v326, %v305
        %v328 = vmul.f32 %v249, %v295
        %v329 = vmul.f32 %v250, %v296
        %v330 = vmul.f32 %v251, %v297
        %v331 = vmul.f32 %v252, %v298
        %v332 = vsel %vm261, %v328, 0.0
        %v333 = vsel %vm261, %v329, 0.0
        %v334 = vadd.f32 %v332, %v333
        %v335 = vsel %vm261, %v330, 0.0
        %v336 = vadd.f32 %v334, %v335
        %v337 = vsel %vm261, %v331, 0.0
        %v338 = vadd.f32 %v336, %v337
        %v339 = vsub.f32 %v327, %v338
        %v344 = vlaneseq
        %v345 = vshrl.u32 %v344, 7
        %v346 = vsub.s32 0, %v345
        %v347 = vrot.slane %v257, %v346
        %v348 = vlaneseq
        %v349 = vshrl.u32 %v348, 7
        %v350 = vsub.s32 0, %v349
        %v351 = vrot.slane %v258, %v350
        %v352 = vlaneseq
        %v353 = vshrl.u32 %v352, 7
        %v354 = vsub.s32 0, %v353
        %v355 = vrot.slane %v259, %v354
        %v356 = vlaneseq
        %v357 = vshrl.u32 %v356, 7
        %v358 = vsub.s32 0, %v357
        %v359 = vrot.slane %v260, %v358
        %v364 = vmul.f32 %v347, %v295
        %v365 = vmul.f32 %v351, %v296
        %v366 = vmul.f32 %v355, %v297
        %v367 = vmul.f32 %v359, %v298
        %v368 = vsel %vm261, %v364, 0.0
        %v369 = vsel %vm261, %v365, 0.0
        %v370 = vadd.f32 %v368, %v369
        %v371 = vsel %vm261, %v366, 0.0
        %v372 = vadd.f32 %v370, %v371
        %v373 = vsel %vm261, %v367, 0.0
        %v374 = vadd.f32 %v372, %v373
        %v375 = vstv %s27
        %v376 = vlaneseq
        %v377 = vshrl.u32 %v376, 7
        %v378 = vlaneseq
        %v379 = vand.u32 %v378, 127
        %s380 = smul.u32 %s28, 2
        %v381 = vstv %s380
        %v382 = vadd.s32 %v381, %v377
        %v383 = vmul.u32 %v382, 128
        %v384 = vadd.s32 %v383, %v379
        %vm385 = vcmp.lt.s32.totalorder %v375, 2
        %vm386 = vcmp.lt.s32.totalorder %v384, 256
        %vm387 = vmand %vm385, %vm386
        %v388 = vmul.f32 %v339, %v374
        %v389 = vsel %vm387, %v388, 0.0
        %v390 = vsel %vm261, %v389, 0.0
        %391 = vadd.xlane.f32.xlu0 %v390
        %v392 = vpop.xlane.xlu0 %391
        %v393 = vrot.slane %v392, 4
        %v394 = vadd.f32 %v392, %v393
        %v395 = vrot.slane %v394, 2
        %v396 = vadd.f32 %v394, %v395
        %v397 = vrot.slane %v396, 1
        %v398 = vadd.f32 %v396, %v397
        %s399 = vtos %v398
        %v400 = vsel %vm387, %v374, 0.0
        %v401 = vsel %vm261, %v400, 0.0
        %402 = vadd.xlane.f32.xlu0 %v401
        %v403 = vpop.xlane.xlu0 %402
        %v404 = vrot.slane %v403, 4
        %v405 = vadd.f32 %v403, %v404
        %v406 = vrot.slane %v405, 2
        %v407 = vadd.f32 %v405, %v406
        %v408 = vrot.slane %v407, 1
        %v409 = vadd.f32 %v407, %v408
        %s410 = vtos %v409
        %vm411 = vcmp.eq.s32.totalorder %v379, 0
        %vm412 = vcmp.eq.s32.totalorder %v377, 0
        %vm413 = vcmp.eq.s32.totalorder %v377, 1
        %v414 = vstv %s410
        %v415 = vsel %vm413, %v414, 0.0
        %v416 = vstv %s399
        %v417 = vsel %vm412, %v416, %v415
        %v418 = vsel %vm411, %v417, 0.0
        %419 = vst [vmem:[%s248] sm:$0xff] %v418
        %s420 = sand.u32 %s122, 1
        %s421 = scalar_lea.sflag [#allocation4], %s420
        %s422 = sand.u32 %s122, 1
        %s423 = smul.addr %s422, 8
        %s424 = scalar_lea.vmem [#allocation7], %s423
        // Predicated region
        $region41: #{tpu_custom_call.1} parent=31 // pred_check
          %p425 = pneg %p132
        $region42: #{tpu_custom_call.1} parent=31 // pred_check_branch
          %427 = sbr.rel (%p425) target = $region44
        $region43: #{tpu_custom_call.1} parent=31 // pred_region
          %s429 = ssub.s32 128, 128
          %430 = vsyncadd %s421, %s429
          %s431 = sadd.s32 %s28, %s27
          %s432 = smul.addr %s431, 128
          %s433 = scalar_lea.hbm %s3, %s432
          %s435 = sshll.u32 %s424, 4
          %s436 = int_to_ptr.vmem [resolvable:$true] %s435
          %438 = dma.vmem_to_hbm [thread:$0]  %s436, 128, %s433, %s421
        $region44: #{tpu_custom_call.1} parent=31 // pred_fallthru
          _
      $region32: #{tpu_custom_call.1} parent=5 // pred_fallthru
        _
      %p439 = scmp.le.s32.totalorder 2, %s18
      // Predicated region
      $region45: #{tpu_custom_call.1} parent=5 // pred_check
        %p440 = pneg %p439
      $region46: #{tpu_custom_call.1} parent=5 // pred_check_branch
        %442 = sbr.rel (%p440) target = $region48
      $region47: #{tpu_custom_call.1} parent=5 // pred_region
        %s443 = ssub.s32 %s18, 2
        // Predicated region
        $region49: #{tpu_custom_call.1} parent=47 // pred_check
          %p444 = pneg %p138
        $region50: #{tpu_custom_call.1} parent=47 // pred_check_branch
          %446 = sbr.rel (%p444) target = $region52
        $region51: #{tpu_custom_call.1} parent=47 // pred_region
          %s447 = sand.u32 %s123, 1
          %s448 = scalar_lea.sflag [#allocation4], %s447
          %s449 = sand.u32 %s123, 1
          %s450 = smul.addr %s449, 8
          %s451 = scalar_lea.vmem [#allocation7], %s450
          %452 = dma.done %s448, 128
        $region52: #{tpu_custom_call.1} parent=47 // pred_fallthru
          _
      $region48: #{tpu_custom_call.1} parent=5 // pred_fallthru
        _
    $region6: #{tpu_custom_call.1} parent=1 // loop_footer
      %s22 = sadd.s32 1, %s18
    $region7: #{tpu_custom_call.1} parent=1 // loop_footer_branch
      %17 = sbr.rel target = $region3
    $region8: #{tpu_custom_call.1} parent=1 // loop_exit
      _
    %453 = vsyncpa [#allocation3], 1
    %s454 = scalar_lea.sflag [#allocation3], 1
    %455 = vsyncpa %s454, 1
    %456 = vsyncpa [#allocation6], 1
    %s457 = scalar_lea.sflag [#allocation6], 1
    %458 = vsyncpa %s457, 1
    %459 = vsyncpa [#allocation4], 1
    %s460 = scalar_lea.sflag [#allocation4], 1
    %461 = vsyncpa %s460, 1

</llo_original>
